<compile_context>
chip_gen: v5e
topology: v5e:2x2
jax: 0.10.0
libtpu: 0.0.40
codegen_flags: <defaults>
</compile_context>

<pallas_src>
import jax
import jax.numpy as jnp
from jax.experimental import pallas as pl
from jax.experimental.pallas import tpu as pltpu

EPS = 1e-5
MAX_TILE_ROWS = 4096      # (4096, 128) f32 tile = 2 MiB per stream buffer
NUM_CORES = 2             # pass-1 megacore split (v7x); harmless on 1-TC chips


def _round_up(a, b):
    return ((a + b - 1) // b) * b


def _make_stats_kernel(tile_rows, tiles_per_core, rows, needs_mask):
    groups = tile_rows // 8

    def kernel(x_ref, sum_ref, sq_ref):
        # (8,128) per-core resident accumulators (constant out block along the
        # inner "arbitrary" axis).
        @pl.when(pl.program_id(1) == 0)
        def _():
            sum_ref[...] = jnp.zeros_like(sum_ref)
            sq_ref[...] = jnp.zeros_like(sq_ref)

        x = x_ref[...]                                   # (tile_rows, 128) f32
        if needs_mask:
            tile_idx = pl.program_id(0) * tiles_per_core + pl.program_id(1)
            row0 = tile_idx * tile_rows
            rid = row0 + jax.lax.broadcasted_iota(jnp.int32, (tile_rows, 128), 0)
            x = jnp.where(rid < rows, x, 0.0)            # mask ragged/overshoot rows
        x3 = x.reshape(groups, 8, 128)
        sum_ref[...] += jnp.sum(x3, axis=0)              # pure VPU adds
        sq_ref[...] += jnp.sum(x3 * x3, axis=0)

    return kernel


def _normalize_kernel(ss_ref, x_ref, o_ref):
    # out = x * scale + shift; fused scale/shift scalars live in SMEM.
    o_ref[...] = x_ref[...] * ss_ref[0] + ss_ref[1]


@jax.jit
def wrapped_batchnorm(x_nchw, weight, bias):
    """Training-mode BatchNorm2d(1) forward. x_nchw: (N, 1, H, W)."""
    N, C, H, W = x_nchw.shape
    assert C == 1, "WrappedBatchNorm wraps nn.BatchNorm2d(1)"
    L = N * C * H * W

    # Lane-dense layout: flatten (C == 1 => no transpose) to (rows, 128).
    # When L % 128 == 0 this is a free reshape (no padded copy, no final slice).
    rows = pl.cdiv(L, 128)
    rem = L % 128
    flat = x_nchw.reshape(-1).astype(jnp.float32)
    if rem:
        flat = jnp.pad(flat, (0, 128 - rem))             # awkward sizes only
    x2d = flat.reshape(rows, 128)

    # Balanced tile sizing; ragged last block handled in-kernel.
    num_tiles = max(pl.cdiv(rows, MAX_TILE_ROWS), 1)
    if rows >= 8 * NUM_CORES:
        # Prefer a multiple of NUM_CORES tiles so both v7x cores get work.
        num_tiles = NUM_CORES * pl.cdiv(num_tiles, NUM_CORES)
    tile_rows = _round_up(pl.cdiv(rows, num_tiles), 8)
    num_tiles = pl.cdiv(rows, tile_rows)
    tiles_per_core = pl.cdiv(num_tiles, NUM_CORES)
    needs_mask = (rows % tile_rows != 0) or (num_tiles != NUM_CORES * tiles_per_core)

    tile_bytes = tile_rows * 128 * 4
    vmem_limit = 4 * tile_bytes + 4 * 1024 * 1024        # 2 in + 2 out bufs + slack

    # ---- pass 1: streaming per-core sum / sum-of-squares ((8,128) partials) --
    def x_map(c, i):
        # Clamp so the DMA never starts fully out of bounds; masked anyway.
        return (jnp.minimum(c * tiles_per_core + i, num_tiles - 1), 0)

    psum, psq = pl.pallas_call(
        _make_stats_kernel(tile_rows, tiles_per_core, rows, needs_mask),
        out_shape=(jax.ShapeDtypeStruct((NUM_CORES * 8, 128), jnp.float32),
                   jax.ShapeDtypeStruct((NUM_CORES * 8, 128), jnp.float32)),
        grid=(NUM_CORES, tiles_per_core),
        in_specs=[pl.BlockSpec((tile_rows, 128), x_map)],
        out_specs=(pl.BlockSpec((8, 128), lambda c, i: (c, 0)),
                   pl.BlockSpec((8, 128), lambda c, i: (c, 0))),
        compiler_params=pltpu.CompilerParams(
            dimension_semantics=("parallel", "arbitrary"),
            vmem_limit_bytes=vmem_limit),
    )(x2d)

    # Tiny (8 KiB) epilogue: fold partials to scalars, build fused scale/shift.
    # Masked rows / pad lanes contribute zero; divide by the true element count.
    total = jnp.sum(psum)
    total_sq = jnp.sum(psq)
    inv_l = 1.0 / L
    mean = total * inv_l
    var = jnp.maximum(total_sq * inv_l - mean * mean, 0.0)   # biased variance
    inv_std = jax.lax.rsqrt(var + EPS)
    gamma = weight.reshape(-1)[0].astype(jnp.float32)
    beta = bias.reshape(-1)[0].astype(jnp.float32)
    scale = gamma * inv_std
    shift = beta - mean * scale
    scale_shift = jnp.stack([scale, shift])                  # (2,) f32 -> SMEM

    # ---- pass 2: out = x * scale + shift (128-lane-dense stores) -------------
    out2d = pl.pallas_call(
        _normalize_kernel,
        out_shape=jax.ShapeDtypeStruct((rows, 128), jnp.float32),
        grid=(num_tiles,),
        in_specs=[pl.BlockSpec(memory_space=pltpu.MemorySpace.SMEM),
                  pl.BlockSpec((tile_rows, 128), lambda i: (i, 0))],
        out_specs=pl.BlockSpec((tile_rows, 128), lambda i: (i, 0)),
        compiler_params=pltpu.CompilerParams(
            dimension_semantics=("parallel",),
            vmem_limit_bytes=vmem_limit),
    )(scale_shift, x2d)

    if rem:
        out = out2d.reshape(-1)[:L].reshape(N, C, H, W)
    else:
        out = out2d.reshape(N, C, H, W)
    return out.astype(x_nchw.dtype)


if __name__ == "__main__":
    key = jax.random.PRNGKey(0)
    # BatchNorm2d(1) => C must be 1
    N, C, H, W = 2, 1, 16, 16
    # Non-trivial mean/std so the normalization is actually exercised.
    x = 2.0 * jax.random.normal(key, (N, C, H, W), dtype=jnp.float32) + 3.0

    # nn.BatchNorm2d default affine init: gamma = 1, beta = 0.
    weight = jnp.ones((C,), dtype=jnp.float32)
    bias = jnp.zeros((C,), dtype=jnp.float32)

    out = wrapped_batchnorm(x, weight, bias)
    out = jax.block_until_ready(out)

    # Reference: plain-JAX training-mode BN (biased variance).
    mean = jnp.mean(x, axis=(0, 2, 3), keepdims=True)
    var = jnp.mean((x - mean) ** 2, axis=(0, 2, 3), keepdims=True)
    ref = (x - mean) / jnp.sqrt(var + EPS) * weight.reshape(1, C, 1, 1) \
          + bias.reshape(1, C, 1, 1)
    assert out.shape == (N, C, H, W)
    assert jnp.max(jnp.abs(out - ref)) < 1e-4

    print("KERNEL_OK")
</pallas_src>

<mosaic_0001>
module attributes {stable_mosaic.version = 11 : i64} {
  func.func @_normalize_kernel(%arg0: i32, %arg1: memref<2xf32, #tpu.memory_space<smem>>, %arg2: memref<8x128xf32, #tpu.memory_space<vmem>>, %arg3: memref<8x128xf32, #tpu.memory_space<vmem>>) attributes {dimension_semantics = [#tpu.dimension_semantics<parallel>], iteration_bounds = array<i64: 1>, scalar_prefetch = 0 : i64, scratch_operands = 0 : i64, tpu.core_type = #tpu.core_type<tc>, window_params = [{transform_indices = @transform_0, window_bounds = array<i64: 2>}, {transform_indices = @transform_1, window_bounds = array<i64: 8, 128>}, {transform_indices = @transform_2, window_bounds = array<i64: 8, 128>}]} {
    %c0 = arith.constant 0 : index
    %c0_0 = arith.constant 0 : index
    %0 = vector.load %arg2[%c0, %c0_0] : memref<8x128xf32, #tpu.memory_space<vmem>>, vector<8x128xf32>
    %c0_1 = arith.constant 0 : index
    %1 = memref.load %arg1[%c0_1] : memref<2xf32, #tpu.memory_space<smem>>
    %2 = vector.broadcast %1 : f32 to vector<8x128xf32>
    %3 = arith.mulf %0, %2 : vector<8x128xf32>
    %c1 = arith.constant 1 : index
    %4 = memref.load %arg1[%c1] : memref<2xf32, #tpu.memory_space<smem>>
    %5 = vector.broadcast %4 : f32 to vector<8x128xf32>
    %6 = arith.addf %3, %5 : vector<8x128xf32>
    %c0_2 = arith.constant 0 : index
    %c0_3 = arith.constant 0 : index
    %7 = vector.load %arg3[%c0_2, %c0_3] : memref<8x128xf32, #tpu.memory_space<vmem>>, vector<8x128xf32>
    tpu.vector_store %arg3[%c0_2, %c0_3], %6 {strides = array<i32>} : memref<8x128xf32, #tpu.memory_space<vmem>>, vector<8x128xf32>,
    return
  }
  func.func @transform_0(%arg0: i32) -> i32 {
    %c0_i32 = arith.constant 0 : i32
    %c0_i32_0 = arith.constant 0 : i32
    return %c0_i32 : i32
  }
  func.func @transform_1(%arg0: i32) -> (i32, i32) {
    %c0_i32 = arith.constant 0 : i32
    %c0_i32_0 = arith.constant 0 : i32
    return %arg0, %c0_i32 : i32, i32
  }
  func.func @transform_2(%arg0: i32) -> (i32, i32) {
    %c0_i32 = arith.constant 0 : i32
    %c0_i32_0 = arith.constant 0 : i32
    return %arg0, %c0_i32 : i32, i32
  }
}

module attributes {stable_mosaic.version = 11 : i64} {
  func.func @kernel(%arg0: i32, %arg1: i32, %arg2: memref<8x128xf32, #tpu.memory_space<vmem>>, %arg3: memref<8x128xf32, #tpu.memory_space<vmem>>, %arg4: memref<8x128xf32, #tpu.memory_space<vmem>>) attributes {dimension_semantics = [#tpu.dimension_semantics<parallel>, #tpu.dimension_semantics<arbitrary>], iteration_bounds = array<i64: 2, 1>, scalar_prefetch = 0 : i64, scratch_operands = 0 : i64, tpu.core_type = #tpu.core_type<tc>, window_params = [{transform_indices = @transform_0, window_bounds = array<i64: 8, 128>}, {transform_indices = @transform_1, window_bounds = array<i64: 8, 128>}, {transform_indices = @transform_2, window_bounds = array<i64: 8, 128>}]} {
    %c0_i32 = arith.constant 0 : i32
    %0 = arith.cmpi eq, %arg1, %c0_i32 : i32
    %1 = arith.extui %0 : i1 to i32
    %c0_i32_0 = arith.constant 0 : i32
    %2 = arith.cmpi ne, %1, %c0_i32_0 : i32
    scf.if %2 {
      %cst_12 = arith.constant 0.000000e+00 : f32
      %24 = vector.broadcast %cst_12 : f32 to vector<8x128xf32>
      %c0_13 = arith.constant 0 : index
      %c0_14 = arith.constant 0 : index
      %25 = vector.load %arg3[%c0_13, %c0_14] : memref<8x128xf32, #tpu.memory_space<vmem>>, vector<8x128xf32>
      tpu.vector_store %arg3[%c0_13, %c0_14], %24 {strides = array<i32>} : memref<8x128xf32, #tpu.memory_space<vmem>>, vector<8x128xf32>,
      %cst_15 = arith.constant 0.000000e+00 : f32
      %26 = vector.broadcast %cst_15 : f32 to vector<8x128xf32>
      %c0_16 = arith.constant 0 : index
      %c0_17 = arith.constant 0 : index
      %27 = vector.load %arg4[%c0_16, %c0_17] : memref<8x128xf32, #tpu.memory_space<vmem>>, vector<8x128xf32>
      tpu.vector_store %arg4[%c0_16, %c0_17], %26 {strides = array<i32>} : memref<8x128xf32, #tpu.memory_space<vmem>>, vector<8x128xf32>,
    } else {
    }
    %c0 = arith.constant 0 : index
    %c0_1 = arith.constant 0 : index
    %3 = vector.load %arg2[%c0, %c0_1] : memref<8x128xf32, #tpu.memory_space<vmem>>, vector<8x128xf32>
    %c1_i32 = arith.constant 1 : i32
    %4 = arith.muli %arg0, %c1_i32 : i32
    %5 = arith.addi %4, %arg1 : i32
    %c8_i32 = arith.constant 8 : i32
    %6 = arith.muli %5, %c8_i32 : i32
    %7 = tpu.iota {dimensions = array<i32: 0>} : vector<8x128xi32>
    %8 = vector.broadcast %6 : i32 to vector<8x128xi32>
    %9 = arith.addi %8, %7 : vector<8x128xi32>
    %c4_i32 = arith.constant 4 : i32
    %10 = vector.broadcast %c4_i32 : i32 to vector<8x128xi32>
    %11 = arith.cmpi slt, %9, %10 : vector<8x128xi32>
    %cst = arith.constant 0.000000e+00 : f32
    %12 = vector.broadcast %cst : f32 to vector<8x128xf32>
    %13 = arith.select %11, %3, %12 : vector<8x128xi1>, vector<8x128xf32>
    %14 = vector.shape_cast %13 : vector<8x128xf32> to vector<1x8x128xf32>
    %c0_2 = arith.constant 0 : index
    %c0_3 = arith.constant 0 : index
    %15 = vector.load %arg3[%c0_2, %c0_3] : memref<8x128xf32, #tpu.memory_space<vmem>>, vector<8x128xf32>
    %cst_4 = arith.constant dense<0.000000e+00> : vector<8x128xf32>
    %16 = vector.multi_reduction <add>, %14, %cst_4 [0] : vector<1x8x128xf32> to vector<8x128xf32>
    %17 = arith.addf %15, %16 : vector<8x128xf32>
    %c0_5 = arith.constant 0 : index
    %c0_6 = arith.constant 0 : index
    %18 = vector.load %arg3[%c0_5, %c0_6] : memref<8x128xf32, #tpu.memory_space<vmem>>, vector<8x128xf32>
    tpu.vector_store %arg3[%c0_5, %c0_6], %17 {strides = array<i32>} : memref<8x128xf32, #tpu.memory_space<vmem>>, vector<8x128xf32>,
    %c0_7 = arith.constant 0 : index
    %c0_8 = arith.constant 0 : index
    %19 = vector.load %arg4[%c0_7, %c0_8] : memref<8x128xf32, #tpu.memory_space<vmem>>, vector<8x128xf32>
    %20 = arith.mulf %14, %14 : vector<1x8x128xf32>
    %cst_9 = arith.constant dense<0.000000e+00> : vector<8x128xf32>
    %21 = vector.multi_reduction <add>, %20, %cst_9 [0] : vector<1x8x128xf32> to vector<8x128xf32>
    %22 = arith.addf %19, %21 : vector<8x128xf32>
    %c0_10 = arith.constant 0 : index
    %c0_11 = arith.constant 0 : index
    %23 = vector.load %arg4[%c0_10, %c0_11] : memref<8x128xf32, #tpu.memory_space<vmem>>, vector<8x128xf32>
    tpu.vector_store %arg4[%c0_10, %c0_11], %22 {strides = array<i32>} : memref<8x128xf32, #tpu.memory_space<vmem>>, vector<8x128xf32>,
    return
  }
  func.func @transform_0(%arg0: i32, %arg1: i32) -> (i32, i32) {
    %c1_i32 = arith.constant 1 : i32
    %0 = arith.muli %arg0, %c1_i32 : i32
    %1 = arith.addi %0, %arg1 : i32
    %c0_i32 = arith.constant 0 : i32
    %2 = arith.minsi %1, %c0_i32 : i32
    %c0_i32_0 = arith.constant 0 : i32
    %c0_i32_1 = arith.constant 0 : i32
    return %2, %c0_i32_0 : i32, i32
  }
  func.func @transform_1(%arg0: i32, %arg1: i32) -> (i32, i32) {
    %c0_i32 = arith.constant 0 : i32
    %c0_i32_0 = arith.constant 0 : i32
    return %arg0, %c0_i32 : i32, i32
  }
  func.func @transform_2(%arg0: i32, %arg1: i32) -> (i32, i32) {
    %c0_i32 = arith.constant 0 : i32
    %c0_i32_0 = arith.constant 0 : i32
    return %arg0, %c0_i32 : i32, i32
  }
}

</mosaic_0001>

<llo_original>
// kernel: wrapped_batchnorm.2
$region0: #{wrapped_batchnorm.2}
  #allocation0 [shape = 'u32[]', space=smem, size = 0x4, offset = 0x4, fixed_abs, tag = 'smem constant byte address 0x4 - core index']
  #allocation1 [shape = 'u32[72,128]{1,0:T(1,128)}', space=vmem, size = 0x9000, scoped, tag = 'internal scratch']
  %s0 = inlined_call_operand.vmem [shape: f32[4,128], index: 0, kind: input, shape index: {}]
  %s1 = inlined_call_operand.vmem [shape: f32[16,128], index: 1, kind: output, shape index: {0}]
  %s2 = inlined_call_operand.vmem [shape: f32[16,128], index: 2, kind: output, shape index: {1}]
  %3 = xla_tuple %s1, %s2
  %s4 = sld [smem:[#allocation0]]
  $region49: #{wrapped_batchnorm.2} parent=0
    _
  %s6 = ssub.s32 1, %s4
  %s7 = scalar_select 0, %s6, %s4
  loop: start=0, step=1, limit=4
  $region2: #{wrapped_batchnorm.2} parent=0 // loop_pre_header
    _
  $region3: #{wrapped_batchnorm.2} parent=0 // loop_header
    %s9 = sphi 0, %s13
    %p10 = scmp.ge.s32.totalorder %s9, 4
    %s16 = sphi 0, %s28
    %s17 = sphi 0, %s24
    %s18 = sphi 0, %s16
    %s19 = sphi 0, %s17
    %s20 = sphi 0, %s18
    %s21 = sphi 0, %s19
    %s37 = sphi 0, %s39
    %s40 = sphi 0, %s37
    %s41 = sphi 0, %s40
    %s57 = sphi 0, %s41
    %s63 = sphi 0, %s65
    %s66 = sphi 0, %s63
    %s67 = sphi 0, %s66
    %s83 = sphi 0, %s67
    %s89 = sphi 0, %s91
    %s92 = sphi 0, %s89
    %s93 = sphi 0, %s92
    %s109 = sphi 0, %s93
  $region4: #{wrapped_batchnorm.2} parent=0 // loop_header_branch
    %12 = sbr.rel (%p10) target = $region8
  $region5: #{wrapped_batchnorm.2} parent=0 // loop_body
    %s14 = ssub.s32 %s9, 1
    %s15 = ssub.s32 %s9, 2
    %s22 = sadd.s32 1, %s17
    %p23 = scmp.ge.s32.totalorder %s22, 1
    %s24 = scalar_select %p23, 0, %s22
    %s25 = sadd.s32 1, %s16
    %s26 = scalar_select %p23, %s25, %s16
    %p27 = scmp.ge.s32.totalorder %s26, 2
    %s28 = scalar_select %p27, 0, %s26
    %s29 = sadd.s32 %s16, %s17
    %p30 = scmp.lt.s32.totalorder %s29, 0
    %s31 = scalar_select %p30, %s29, 0
    %s32 = sadd.s32 %s28, %s24
    %p33 = scmp.lt.s32.totalorder %s32, 0
    %s34 = scalar_select %p33, %s32, 0
    %s35 = ssub.s32 %s31, %s34
    %p36 = scmp.eq.s32.totalorder %s35, 0
    %s38 = sadd.s32 %s37, 1
    %s39 = scalar_select %p36, %s37, %s38
    %p42 = pneg %p36
    %p43 = scmp.eq.s32.totalorder %s9, 1
    %p44 = por %p42, %p43
    %p45 = scmp.ne.s32.totalorder %s37, %s40
    %p46 = scmp.eq.s32.totalorder %s9, 0
    %p47 = por %p45, %p46
    %p48 = scmp.ne.s32.totalorder %s37, %s40
    %p49 = scmp.eq.s32.totalorder %s14, 1
    %p50 = por %p48, %p49
    %p51 = scmp.ne.s32.totalorder %s40, %s41
    %p52 = scmp.eq.s32.totalorder %s14, 0
    %p53 = por %p51, %p52
    %p54 = scmp.ne.s32.totalorder %s40, %s41
    %p55 = scmp.eq.s32.totalorder %s15, 1
    %p56 = por %p54, %p55
    %p58 = scmp.ne.s32.totalorder %s41, %s57
    %p59 = scmp.eq.s32.totalorder %s15, 0
    %p60 = por %p58, %p59
    %s61 = ssub.s32 %s16, %s28
    %p62 = scmp.eq.s32.totalorder %s61, 0
    %s64 = sadd.s32 %s63, 1
    %s65 = scalar_select %p62, %s63, %s64
    %p68 = pneg %p62
    %p69 = scmp.eq.s32.totalorder %s9, 1
    %p70 = por %p68, %p69
    %p71 = scmp.ne.s32.totalorder %s63, %s66
    %p72 = scmp.eq.s32.totalorder %s9, 0
    %p73 = por %p71, %p72
    %p74 = scmp.ne.s32.totalorder %s63, %s66
    %p75 = scmp.eq.s32.totalorder %s14, 1
    %p76 = por %p74, %p75
    %p77 = scmp.ne.s32.totalorder %s66, %s67
    %p78 = scmp.eq.s32.totalorder %s14, 0
    %p79 = por %p77, %p78
    %p80 = scmp.ne.s32.totalorder %s66, %s67
    %p81 = scmp.eq.s32.totalorder %s15, 1
    %p82 = por %p80, %p81
    %p84 = scmp.ne.s32.totalorder %s67, %s83
    %p85 = scmp.eq.s32.totalorder %s15, 0
    %p86 = por %p84, %p85
    %s87 = ssub.s32 %s16, %s28
    %p88 = scmp.eq.s32.totalorder %s87, 0
    %s90 = sadd.s32 %s89, 1
    %s91 = scalar_select %p88, %s89, %s90
    %p94 = pneg %p88
    %p95 = scmp.eq.s32.totalorder %s9, 1
    %p96 = por %p94, %p95
    %p97 = scmp.ne.s32.totalorder %s89, %s92
    %p98 = scmp.eq.s32.totalorder %s9, 0
    %p99 = por %p97, %p98
    %p100 = scmp.ne.s32.totalorder %s89, %s92
    %p101 = scmp.eq.s32.totalorder %s14, 1
    %p102 = por %p100, %p101
    %p103 = scmp.ne.s32.totalorder %s92, %s93
    %p104 = scmp.eq.s32.totalorder %s14, 0
    %p105 = por %p103, %p104
    %p106 = scmp.ne.s32.totalorder %s92, %s93
    %p107 = scmp.eq.s32.totalorder %s15, 1
    %p108 = por %p106, %p107
    %p110 = scmp.ne.s32.totalorder %s93, %s109
    %p111 = scmp.eq.s32.totalorder %s15, 0
    %p112 = por %p110, %p111
    %p113 = scmp.le.s32.totalorder 1, %s9
    %p114 = scmp.lt.s32.totalorder %s9, 3
    %p115 = pnand %p113, %p114
    %p116 = pneg %p115
    // Predicated region
    $region9: #{wrapped_batchnorm.2} parent=5 // pred_check
      _
    $region10: #{wrapped_batchnorm.2} parent=5 // pred_check_branch
      %118 = sbr.rel (%p115) target = $region12
    $region11: #{wrapped_batchnorm.2} parent=5 // pred_region
      %s119 = ssub.s32 %s9, 1
    $region12: #{wrapped_batchnorm.2} parent=5 // pred_fallthru
      _
    %p120 = scmp.lt.s32.totalorder %s9, 2
    // Predicated region
    $region13: #{wrapped_batchnorm.2} parent=5 // pred_check
      %p121 = pneg %p120
    $region14: #{wrapped_batchnorm.2} parent=5 // pred_check_branch
      %123 = sbr.rel (%p121) target = $region16
    $region15: #{wrapped_batchnorm.2} parent=5 // pred_region
      // Predicated region
      $region17: #{wrapped_batchnorm.2} parent=15 // pred_check
        %p124 = pneg %p47
      $region18: #{wrapped_batchnorm.2} parent=15 // pred_check_branch
        %126 = sbr.rel (%p124) target = $region20
      $region19: #{wrapped_batchnorm.2} parent=15 // pred_region
        %s127 = sadd.s32 %s16, %s17
        %p128 = scmp.lt.s32.totalorder %s127, 0
        %s129 = scalar_select %p128, %s127, 0
        %s130 = smul.u32 2, %s129
        %s131 = ssub.s32 1, %s130
        %s132 = smul.u32 4, %s131
        %p133 = scmp.lt.s32.totalorder %s130, 0
        %s134 = scalar_select %p133, %s130, 0
        %s135 = smul.addr %s134, 4
        %s136 = scalar_lea.vmem %s0, %s135
        %s137 = sadd.s32 %s16, %s17
        %p138 = scmp.lt.s32.totalorder %s137, 0
        %s139 = scalar_select %p138, %s137, 0
        %s140 = smul.u32 2, %s139
        %s141 = ssub.s32 1, %s140
        %s142 = smul.u32 4, %s141
      $region20: #{wrapped_batchnorm.2} parent=15 // pred_fallthru
        _
    $region16: #{wrapped_batchnorm.2} parent=5 // pred_fallthru
      _
    %p143 = scmp.le.s32.totalorder 1, %s9
    %p144 = scmp.lt.s32.totalorder %s9, 3
    %p145 = pnand %p143, %p144
    %p146 = pneg %p145
    // Predicated region
    $region21: #{wrapped_batchnorm.2} parent=5 // pred_check
      _
    $region22: #{wrapped_batchnorm.2} parent=5 // pred_check_branch
      %148 = sbr.rel (%p145) target = $region24
    $region23: #{wrapped_batchnorm.2} parent=5 // pred_region
      %s149 = ssub.s32 %s9, 1
      %s150 = sadd.s32 %s18, %s19
      %p151 = scmp.lt.s32.totalorder %s150, 0
      %s152 = scalar_select %p151, %s150, 0
      %s153 = smul.u32 2, %s152
      %s154 = ssub.s32 1, %s153
      %s155 = smul.u32 4, %s154
      %p156 = scmp.lt.s32.totalorder %s153, 0
      %s157 = scalar_select %p156, %s153, 0
      %s158 = smul.addr %s157, 4
      %s159 = scalar_lea.vmem %s0, %s158
      %p160 = pneg %p53
      %p161 = pneg %p50
      %p162 = pneg %p79
      %p163 = pneg %p76
      %p164 = scmp.lt.s32.totalorder %s18, 1
      %s165 = scalar_select %p164, %s18, 1
      %s166 = smul.addr %s165, 8
      %s167 = scalar_lea.vmem %s1, %s166
      %p168 = pneg %p105
      %p169 = pneg %p102
      %p170 = scmp.lt.s32.totalorder %s18, 1
      %s171 = scalar_select %p170, %s18, 1
      %s172 = smul.addr %s171, 8
      %s173 = scalar_lea.vmem %s2, %s172
      %s174 = sadd.s32 %s18, %s19
      %p175 = scmp.lt.s32.totalorder %s174, 0
      %s176 = scalar_select %p175, %s174, 0
      %s177 = smul.u32 2, %s176
      %s178 = ssub.s32 1, %s177
      %s179 = smul.u32 4, %s178
      %p180 = scmp.lt.s32.totalorder %s177, 0
      %s181 = scalar_select %p180, %s177, 0
      %s182 = smul.addr %s181, 4
      %s183 = scalar_lea.vmem %s0, %s182
      %s184 = sadd.s32 %s18, %s19
      %p185 = scmp.lt.s32.totalorder %s184, 0
      %s186 = scalar_select %p185, %s184, 0
      %s187 = smul.u32 2, %s186
      %s188 = ssub.s32 1, %s187
      %s189 = smul.u32 4, %s188
      %p190 = scmp.lt.s32.totalorder %s18, 1
      %s191 = scalar_select %p190, %s18, 1
      %s192 = smul.addr %s191, 8
      %s193 = scalar_lea.vmem %s1, %s192
      %p194 = scmp.lt.s32.totalorder %s18, 1
      %s195 = scalar_select %p194, %s18, 1
      %s196 = smul.addr %s195, 8
      %s197 = scalar_lea.vmem %s2, %s196
      %p198 = scmp.eq.s32.totalorder %s19, 0
      // Predicated region
      $region25: #{wrapped_batchnorm.2} parent=23 // pred_check
        %p199 = pneg %p198
      $region26: #{wrapped_batchnorm.2} parent=23 // pred_check_branch
        %201 = sbr.rel (%p199) target = $region28
      $region27: #{wrapped_batchnorm.2} parent=23 // pred_region
        %202 = vst [vmem:[%s193] sm:$0xff] 0.0
        %203 = vst [vmem:[%s197] sm:$0xff] 0.0
      $region28: #{wrapped_batchnorm.2} parent=23 // pred_fallthru
        _
      %v204 = vld [vmem:[%s183] sm:$0xff]
      %s205 = sadd.s32 %s18, %s19
      %s206 = smul.u32 %s205, 8
      %v207 = vlaneseq
      %v208 = vshrl.u32 %v207, 7
      %v209 = vstv %s206
      %v210 = vadd.s32 %v209, %v208
      %vm211 = vcmp.lt.s32.totalorder %v210, 4
      %v212 = vsel %vm211, %v204, 0.0
      %v213 = vld [vmem:[%s193] sm:$0xff]
      %v214 = vadd.f32 %v212, 0.0
      %v215 = vadd.f32 %v213, %v214
      %216 = vst [vmem:[%s193] sm:$0xff] %v215
      %v217 = vld [vmem:[%s197] sm:$0xff]
      %v218 = vmul.f32 %v212, %v212
      %v219 = vadd.f32 %v218, 0.0
      %v220 = vadd.f32 %v217, %v219
      %221 = vst [vmem:[%s197] sm:$0xff] %v220
      %p222 = scmp.lt.s32.totalorder %s18, 1
      %s223 = scalar_select %p222, %s18, 1
      %s224 = smul.addr %s223, 8
      %s225 = scalar_lea.vmem %s1, %s224
      %p226 = scmp.lt.s32.totalorder %s18, 1
      %s227 = scalar_select %p226, %s18, 1
      %s228 = smul.addr %s227, 8
      %s229 = scalar_lea.vmem %s2, %s228
      // Predicated region
      $region29: #{wrapped_batchnorm.2} parent=23 // pred_check
        %p230 = pneg %p76
      $region30: #{wrapped_batchnorm.2} parent=23 // pred_check_branch
        %232 = sbr.rel (%p230) target = $region32
      $region31: #{wrapped_batchnorm.2} parent=23 // pred_region
        _
      $region32: #{wrapped_batchnorm.2} parent=23 // pred_fallthru
        _
      // Predicated region
      $region33: #{wrapped_batchnorm.2} parent=23 // pred_check
        %p233 = pneg %p102
      $region34: #{wrapped_batchnorm.2} parent=23 // pred_check_branch
        %235 = sbr.rel (%p233) target = $region36
      $region35: #{wrapped_batchnorm.2} parent=23 // pred_region
        _
      $region36: #{wrapped_batchnorm.2} parent=23 // pred_fallthru
        _
    $region24: #{wrapped_batchnorm.2} parent=5 // pred_fallthru
      _
    %p236 = scmp.le.s32.totalorder 2, %s9
    // Predicated region
    $region37: #{wrapped_batchnorm.2} parent=5 // pred_check
      %p237 = pneg %p236
    $region38: #{wrapped_batchnorm.2} parent=5 // pred_check_branch
      %239 = sbr.rel (%p237) target = $region40
    $region39: #{wrapped_batchnorm.2} parent=5 // pred_region
      %s240 = ssub.s32 %s9, 2
      // Predicated region
      $region41: #{wrapped_batchnorm.2} parent=39 // pred_check
        %p241 = pneg %p82
      $region42: #{wrapped_batchnorm.2} parent=39 // pred_check_branch
        %243 = sbr.rel (%p241) target = $region44
      $region43: #{wrapped_batchnorm.2} parent=39 // pred_region
        %p244 = scmp.lt.s32.totalorder %s20, 1
        %s245 = scalar_select %p244, %s20, 1
        %s246 = smul.addr %s245, 8
        %s247 = scalar_lea.vmem %s1, %s246
      $region44: #{wrapped_batchnorm.2} parent=39 // pred_fallthru
        _
      // Predicated region
      $region45: #{wrapped_batchnorm.2} parent=39 // pred_check
        %p248 = pneg %p108
      $region46: #{wrapped_batchnorm.2} parent=39 // pred_check_branch
        %250 = sbr.rel (%p248) target = $region48
      $region47: #{wrapped_batchnorm.2} parent=39 // pred_region
        %p251 = scmp.lt.s32.totalorder %s20, 1
        %s252 = scalar_select %p251, %s20, 1
        %s253 = smul.addr %s252, 8
        %s254 = scalar_lea.vmem %s2, %s253
      $region48: #{wrapped_batchnorm.2} parent=39 // pred_fallthru
        _
    $region40: #{wrapped_batchnorm.2} parent=5 // pred_fallthru
      _
  $region6: #{wrapped_batchnorm.2} parent=0 // loop_footer
    %s13 = sadd.s32 1, %s9
  $region7: #{wrapped_batchnorm.2} parent=0 // loop_footer_branch
    %8 = sbr.rel target = $region3
  $region8: #{wrapped_batchnorm.2} parent=0 // loop_exit
    _

// kernel: wrapped_batchnorm.3
$region0: #{wrapped_batchnorm.3}
  #allocation0 [shape = 'u32[]', space=smem, size = 0x4, offset = 0x4, fixed_abs, tag = 'smem constant byte address 0x4 - core index']
  #allocation1 [shape = 'u32[72,128]{1,0:T(1,128)}', space=vmem, size = 0x9000, scoped, tag = 'internal scratch']
  %s0 = inlined_call_operand.vmem [shape: f32[2], index: 0, kind: input, shape index: {}]
  %s1 = inlined_call_operand.vmem [shape: f32[4,128], index: 1, kind: input, shape index: {}]
  %s2 = inlined_call_operand.vmem [shape: f32[4,128], index: 2, kind: output, shape index: {}]
  %s3 = sld [smem:[#allocation0]]
  $region52: #{wrapped_batchnorm.3} parent=0
    _
  %s5 = ssub.s32 1, %s3
  %s6 = scalar_select 0, %s5, %s3
  $region1: #{wrapped_batchnorm.3} parent=0
    #allocation2 [shape = 'u8[512]{0}', space=smem, size = 0x200, scoped, tag = 'input window, operand 0, single buffered']
    #allocation3 [shape = 's32[1]{0}', space=sflag, size = 0x4, scoped, tag = 'scoped memory for wrapped_batchnorm.3']
    #allocation4 [shape = 'u8[4096]{0}', space=vmem, size = 0x1000, scoped, tag = 'output window, operand 0, single buffered']
    %7 = vsyncpa [#allocation3], 0
    // Predicated region
    $region2: #{wrapped_batchnorm.3} parent=1 // pred_check
      _
    $region3: #{wrapped_batchnorm.3} parent=1 // pred_check_branch
      %9 = sbr.rel (0) target = $region5
    $region4: #{wrapped_batchnorm.3} parent=1 // pred_region
      %11 = vsyncadd [#allocation3], 0
      %s13 = sshll.u32 %s0, 4
      %s14 = int_to_ptr.vmem [resolvable:$true] %s13
      %16 = dma.vmem_to_smem %s14, 16, [#allocation2], [#allocation3]
    $region5: #{wrapped_batchnorm.3} parent=1 // pred_fallthru
      _
    // Predicated region
    $region6: #{wrapped_batchnorm.3} parent=1 // pred_check
      _
    $region7: #{wrapped_batchnorm.3} parent=1 // pred_check_branch
      %18 = sbr.rel (0) target = $region9
    $region8: #{wrapped_batchnorm.3} parent=1 // pred_region
      _
    $region9: #{wrapped_batchnorm.3} parent=1 // pred_fallthru
      _
    // Predicated region
    $region10: #{wrapped_batchnorm.3} parent=1 // pred_check
      _
    $region11: #{wrapped_batchnorm.3} parent=1 // pred_check_branch
      %20 = sbr.rel (0) target = $region13
    $region12: #{wrapped_batchnorm.3} parent=1 // pred_region
      %22 = dma.done [#allocation3], 16
    $region13: #{wrapped_batchnorm.3} parent=1 // pred_fallthru
      _
    %23 = sfence
    %v24 = vld [vmem:[%s1] sm:$0xff]
    %s25 = sld [smem:[#allocation2]]
    %v26 = vstv %s25
    %v27 = vmul.f32 %v24, %v26
    %s28 = sld [smem:[#allocation2 + $0x1]]
    %v29 = vstv %s28
    %v30 = vadd.f32 %v27, %v29
    %31 = vst [vmem:[#allocation4] sm:$0xff] %v30
    // Predicated region
    $region14: #{wrapped_batchnorm.3} parent=1 // pred_check
      _
    $region15: #{wrapped_batchnorm.3} parent=1 // pred_check_branch
      %33 = sbr.rel (0) target = $region17
    $region16: #{wrapped_batchnorm.3} parent=1 // pred_region
      // Predicated region
      $region18: #{wrapped_batchnorm.3} parent=16 // pred_check
        _
      $region19: #{wrapped_batchnorm.3} parent=16 // pred_check_branch
        %35 = sbr.rel (0) target = $region21
      $region20: #{wrapped_batchnorm.3} parent=16 // pred_region
        // Predicated region
        $region22: #{wrapped_batchnorm.3} parent=20 // pred_check
          _
        $region23: #{wrapped_batchnorm.3} parent=20 // pred_check_branch
          %37 = sbr.rel target = $region25
        $region24: #{wrapped_batchnorm.3} parent=20 // pred_region
          // Predicated region
          $region37: #{wrapped_batchnorm.3} parent=24 // pred_check
            _
          $region38: #{wrapped_batchnorm.3} parent=24 // pred_check_branch
            %53 = sbr.rel (0) target = $region40
          $region39: #{wrapped_batchnorm.3} parent=24 // pred_region
            %s55 = ssub.s32 16, 1
            loop: start=0, step=1, limit=1
            $region41: #{wrapped_batchnorm.3} parent=39 // loop_pre_header
              _
            $region42: #{wrapped_batchnorm.3} parent=39 // loop_header
              %s57 = sphi 0, %s61
              %p58 = scmp.ge.s32.totalorder %s57, 1
              %s62 = sphi [#allocation4], [#allocation4]
              %s63 = sphi %s2, %s2
            $region43: #{wrapped_batchnorm.3} parent=39 // loop_header_branch
              %60 = sbr.rel (%p58) target = $region47
            $region44: #{wrapped_batchnorm.3} parent=39 // loop_body
              %v64 = vld [vmem:[%s62] sm:%s55]
              %65 = vst [vmem:[%s63] sm:%s55] %v64
            $region45: #{wrapped_batchnorm.3} parent=39 // loop_footer
              %s61 = sadd.s32 1, %s57
            $region46: #{wrapped_batchnorm.3} parent=39 // loop_footer_branch
              %56 = sbr.rel target = $region42
            $region47: #{wrapped_batchnorm.3} parent=39 // loop_exit
              _
          $region40: #{wrapped_batchnorm.3} parent=24 // pred_fallthru
            _
        $region25: #{wrapped_batchnorm.3} parent=20 // pred_fallthru
          _
        // Predicated region
        $region26: #{wrapped_batchnorm.3} parent=20 // pred_check
          _
        $region27: #{wrapped_batchnorm.3} parent=20 // pred_check_branch
          %39 = sbr.rel (0) target = $region29
        $region28: #{wrapped_batchnorm.3} parent=20 // pred_region
          %s41 = ssub.s32 16, 1
          loop: start=0, step=1, limit=1
          $region30: #{wrapped_batchnorm.3} parent=28 // loop_pre_header
            _
          $region31: #{wrapped_batchnorm.3} parent=28 // loop_header
            %s43 = sphi 0, %s47
            %p44 = scmp.ge.s32.totalorder %s43, 1
            %s48 = sphi [#allocation4], [#allocation4]
            %s49 = sphi %s2, %s2
          $region32: #{wrapped_batchnorm.3} parent=28 // loop_header_branch
            %46 = sbr.rel (%p44) target = $region36
          $region33: #{wrapped_batchnorm.3} parent=28 // loop_body
            %v50 = vld [vmem:[%s48] sm:%s41]
            %51 = vst [vmem:[%s49] sm:%s41] %v50
          $region34: #{wrapped_batchnorm.3} parent=28 // loop_footer
            %s47 = sadd.s32 1, %s43
          $region35: #{wrapped_batchnorm.3} parent=28 // loop_footer_branch
            %42 = sbr.rel target = $region31
          $region36: #{wrapped_batchnorm.3} parent=28 // loop_exit
            _
        $region29: #{wrapped_batchnorm.3} parent=20 // pred_fallthru
          _
      $region21: #{wrapped_batchnorm.3} parent=16 // pred_fallthru
        _
      %66 = vnop
    $region17: #{wrapped_batchnorm.3} parent=1 // pred_fallthru
      _
    // Predicated region
    $region48: #{wrapped_batchnorm.3} parent=1 // pred_check
      _
    $region49: #{wrapped_batchnorm.3} parent=1 // pred_check_branch
      %68 = sbr.rel (0) target = $region51
    $region50: #{wrapped_batchnorm.3} parent=1 // pred_region
      _
    $region51: #{wrapped_batchnorm.3} parent=1 // pred_fallthru
      _
    %69 = vsyncpa [#allocation3], 1

</llo_original>
